<compile_context>
chip_gen: v5e
topology: v5e:2x2
jax: 0.10.0
libtpu: 0.0.40
codegen_flags: <defaults>
</compile_context>

<pallas_src>
import jax
import jax.numpy as jnp
import numpy as np
from jax.experimental import pallas as pl
from jax.experimental.pallas import tpu as pltpu


def _round_up(a, b):
    return ((a + b - 1) // b) * b


def _block_diag_kernel(x_ref, w_ref, b_ref, o_ref):
    # x_ref: (TB, in_features)   w_ref: (in_features, out_features)
    # b_ref: (1, out_features) f32   o_ref: (TB, out_features)
    acc = jnp.dot(x_ref[...], w_ref[...], preferred_element_type=jnp.float32)
    o_ref[...] = (acc + b_ref[...]).astype(o_ref.dtype)


def _choose_batch_tile(batch, in_features, out_features, io_bytes, out_bytes,
                       sublane, batch_tile, vmem_tile_budget=40 * 1024 * 1024):
    tb = batch_tile if batch_tile is not None else 512
    tb = min(tb, _round_up(batch, sublane))
    tb = max(sublane, _round_up(tb, sublane))

    # Feed both v7x TensorCores: ensure the 'parallel' grid axis has >= 2 steps
    # whenever the batch allows it.
    if pl.cdiv(batch, tb) < 2 and batch > sublane:
        tb = max(sublane, _round_up(pl.cdiv(batch, 2), sublane))

    def vmem_bytes(t):
        streamed = 2 * t * (in_features * io_bytes + out_features * out_bytes)  # 2x = double-buffered
        resident = in_features * out_features * io_bytes + out_features * 4
        return streamed + resident

    # Shrink the tile until the streamed + resident working set fits a budget
    # that is safe on v7x (64 MiB physical VMEM) and on v5e once the scoped
    # limit is raised explicitly below.
    while tb > sublane and vmem_bytes(tb) > vmem_tile_budget:
        tb = max(sublane, _round_up(tb // 2, sublane))
    return tb, vmem_bytes(tb)


def block_diagonal(x, weights, biases, *, io_dtype=jnp.bfloat16, batch_tile=None):
    """BlockDiagonal forward.

    x:       (batch, in_features)
    weights: (num_blocks, block_in, block_out)   (per-block torch W.T)
    biases:  (num_blocks, block_out)
    returns  (batch, out_features) in x.dtype
    """
    nb, bi, bo = weights.shape
    batch, in_features = x.shape
    assert in_features == nb * bi
    out_features = nb * bo

    # Build the dense block-diagonal weight once in the wrapper (small; it is
    # DMA'd into VMEM once per call via a constant index_map).
    w_dense = jnp.zeros((in_features, out_features), dtype=weights.dtype)
    for j in range(nb):
        w_dense = w_dense.at[j * bi:(j + 1) * bi, j * bo:(j + 1) * bo].set(weights[j])
    w_dense = w_dense.astype(io_dtype)

    x_io = x.astype(io_dtype)
    bias2d = biases.reshape(1, out_features).astype(jnp.float32)

    io_bytes = jnp.dtype(io_dtype).itemsize
    out_bytes = jnp.dtype(x.dtype).itemsize
    # Sublane packing: 8 rows per vreg for 32-bit, 16 for bf16, 32 for 8-bit.
    sublane = max(8, 32 // io_bytes)

    tb, vmem_need = _choose_batch_tile(batch, in_features, out_features,
                                       io_bytes, out_bytes, sublane, batch_tile)
    grid = (pl.cdiv(batch, tb),)

    flops = 2 * batch * in_features * out_features
    bytes_accessed = (batch * in_features * io_bytes
                      + in_features * out_features * io_bytes
                      + out_features * 4
                      + batch * out_features * out_bytes)
    vmem_limit = int(min(64 * 1024 * 1024, max(16 * 1024 * 1024, 2 * vmem_need)))

    out = pl.pallas_call(
        _block_diag_kernel,
        out_shape=jax.ShapeDtypeStruct((batch, out_features), x.dtype),
        grid=grid,
        in_specs=[
            # x: one batch tile per grid step (partial last tile handled by
            # Pallas boundary masking; padded rows are never stored or reused).
            pl.BlockSpec((tb, in_features), lambda i: (i, 0)),
            # block-diagonal weight: constant index -> resident in VMEM, DMA'd once.
            pl.BlockSpec((in_features, out_features), lambda i: (0, 0)),
            # bias (f32): constant index -> resident in VMEM.
            pl.BlockSpec((1, out_features), lambda i: (0, 0)),
        ],
        # Output written directly in (batch, out_features) layout; lane-dense as
        # long as out_features is a multiple of 128 (true for real xLSTM widths).
        out_specs=pl.BlockSpec((tb, out_features), lambda i: (i, 0)),
        compiler_params=pltpu.CompilerParams(
            dimension_semantics=("parallel",),
            vmem_limit_bytes=vmem_limit),
        cost_estimate=pl.CostEstimate(flops=flops, transcendentals=0,
                                      bytes_accessed=bytes_accessed),
    )(x_io, w_dense, bias2d)
    return out


def _reference_np(x, weights, biases):
    """float64 numpy ground truth for BlockDiagonal.forward."""
    x64 = np.asarray(x, dtype=np.float64)
    w64 = np.asarray(weights, dtype=np.float64)
    b64 = np.asarray(biases, dtype=np.float64)
    nb, bi, bo = w64.shape
    batch = x64.shape[0]
    chunks = x64.reshape(batch, nb, bi)
    outs = [chunks[:, j, :] @ w64[j] + b64[j] for j in range(nb)]
    return np.concatenate(outs, axis=-1)


if __name__ == "__main__":
    # Small BlockDiagonal config consistent with sLSTMBlock.Wz:
    # in_features = input_size, out_features = hidden_size, num_blocks = num_heads.
    in_features, out_features, num_blocks = 256, 256, 4
    block_in = in_features // num_blocks
    block_out = out_features // num_blocks
    batch = 24  # not a multiple of the tile -> exercises boundary masking

    key = jax.random.PRNGKey(0)
    kx, kw, kb = jax.random.split(key, 3)

    # Deterministic nn.Linear-style init: U(-1/sqrt(block_in), 1/sqrt(block_in)).
    bound = 1.0 / np.sqrt(block_in)
    weights = jax.random.uniform(kw, (num_blocks, block_in, block_out),
                                 minval=-bound, maxval=bound, dtype=jnp.float32)
    biases = jax.random.uniform(kb, (num_blocks, block_out),
                                minval=-bound, maxval=bound, dtype=jnp.float32)
    x = jax.random.normal(kx, (batch, in_features), dtype=jnp.float32)

    y_ref = _reference_np(x, weights, biases)

    # f32 I/O path (exact module semantics; tolerance allows for MXU f32 pass precision).
    y_f32 = jax.block_until_ready(
        block_diagonal(x, weights, biases, io_dtype=jnp.float32))
    np.testing.assert_allclose(np.asarray(y_f32, dtype=np.float64), y_ref,
                               rtol=2e-2, atol=2e-2)

    # bf16 I/O path (default: halves HBM traffic; f32 accumulation + f32 bias add).
    y_bf16 = jax.block_until_ready(block_diagonal(x, weights, biases))
    np.testing.assert_allclose(np.asarray(y_bf16, dtype=np.float64), y_ref,
                               rtol=5e-2, atol=5e-2)

    print("KERNEL_OK")
</pallas_src>

<mosaic_0001>
module attributes {stable_mosaic.version = 11 : i64} {
  func.func @_block_diag_kernel(%arg0: i32, %arg1: memref<16x256xf32, #tpu.memory_space<vmem>>, %arg2: memref<256x256xf32, #tpu.memory_space<vmem>>, %arg3: memref<1x256xf32, #tpu.memory_space<vmem>>, %arg4: memref<16x256xf32, #tpu.memory_space<vmem>>) attributes {dimension_semantics = [#tpu.dimension_semantics<parallel>], iteration_bounds = array<i64: 2>, scalar_prefetch = 0 : i64, scratch_operands = 0 : i64, tpu.core_type = #tpu.core_type<tc>, window_params = [{transform_indices = @transform_0, window_bounds = array<i64: 16, 256>}, {pipeline_mode = #tpu.pipeline_mode<synchronous>, transform_indices = @transform_1, window_bounds = array<i64: 256, 256>}, {pipeline_mode = #tpu.pipeline_mode<synchronous>, transform_indices = @transform_2, window_bounds = array<i64: 1, 256>}, {transform_indices = @transform_3, window_bounds = array<i64: 16, 256>}]} {
    %c0 = arith.constant 0 : index
    %c0_0 = arith.constant 0 : index
    %0 = vector.load %arg1[%c0, %c0_0] : memref<16x256xf32, #tpu.memory_space<vmem>>, vector<16x256xf32>
    %c0_1 = arith.constant 0 : index
    %c0_2 = arith.constant 0 : index
    %1 = vector.load %arg2[%c0_1, %c0_2] : memref<256x256xf32, #tpu.memory_space<vmem>>, vector<256x256xf32>
    %cst = arith.constant dense<0.000000e+00> : vector<16x256xf32>
    %2 = tpu.matmul %0, %1, %cst {dimension_numbers = #tpu.dot_dimension_numbers<[1], [0], [0], [1], [0, 0, 1, 1], [], []>} : vector<16x256xf32>, vector<256x256xf32>, vector<16x256xf32> -> vector<16x256xf32>
    %c0_3 = arith.constant 0 : index
    %c0_4 = arith.constant 0 : index
    %3 = vector.load %arg3[%c0_3, %c0_4] : memref<1x256xf32, #tpu.memory_space<vmem>>, vector<1x256xf32>
    %4 = vector.broadcast %3 : vector<1x256xf32> to vector<16x256xf32>
    %5 = arith.addf %2, %4 : vector<16x256xf32>
    %c0_5 = arith.constant 0 : index
    %c0_6 = arith.constant 0 : index
    %6 = vector.load %arg4[%c0_5, %c0_6] : memref<16x256xf32, #tpu.memory_space<vmem>>, vector<16x256xf32>
    tpu.vector_store %arg4[%c0_5, %c0_6], %5 {strides = array<i32>} : memref<16x256xf32, #tpu.memory_space<vmem>>, vector<16x256xf32>,
    return
  }
  func.func @transform_0(%arg0: i32) -> (i32, i32) {
    %c0_i32 = arith.constant 0 : i32
    %c0_i32_0 = arith.constant 0 : i32
    return %arg0, %c0_i32 : i32, i32
  }
  func.func @transform_1(%arg0: i32) -> (i32, i32) {
    %c0_i32 = arith.constant 0 : i32
    %c0_i32_0 = arith.constant 0 : i32
    %c0_i32_1 = arith.constant 0 : i32
    return %c0_i32, %c0_i32_0 : i32, i32
  }
  func.func @transform_2(%arg0: i32) -> (i32, i32) {
    %c0_i32 = arith.constant 0 : i32
    %c0_i32_0 = arith.constant 0 : i32
    %c0_i32_1 = arith.constant 0 : i32
    return %c0_i32, %c0_i32_0 : i32, i32
  }
  func.func @transform_3(%arg0: i32) -> (i32, i32) {
    %c0_i32 = arith.constant 0 : i32
    %c0_i32_0 = arith.constant 0 : i32
    return %arg0, %c0_i32 : i32, i32
  }
}

</mosaic_0001>

<llo_original>
// kernel: tpu_custom_call.1
$region0: #{tpu_custom_call.1}
  #allocation0 [shape = 'u32[]', space=smem, size = 0x4, offset = 0x4, fixed_abs, tag = 'smem constant byte address 0x4 - core index']
  #allocation1 [shape = 'u32[72,128]{1,0:T(1,128)}', space=vmem, size = 0x9000, scoped, tag = 'internal scratch']
  %s0 = inlined_call_operand.hbm [shape: f32[24,256], index: 0, kind: input, shape index: {}]
  %s1 = inlined_call_operand.hbm [shape: f32[256,256], index: 1, kind: input, shape index: {}]
  %s2 = inlined_call_operand.hbm [shape: f32[1,256], index: 2, kind: input, shape index: {}]
  %s3 = inlined_call_operand.hbm [shape: f32[24,256], index: 3, kind: output, shape index: {}]
  %s4 = sld [smem:[#allocation0]]
  $region57: #{tpu_custom_call.1} parent=0
    _
  %s6 = ssub.s32 1, %s4
  %s7 = scalar_select 0, %s6, %s4
  $region1: #{tpu_custom_call.1} parent=0
    #allocation2 [shape = 'u8[32768]{0}', space=vmem, size = 0x8000, scoped, tag = 'input window, operand 0']
    #allocation3 [shape = 's32[2]{0}', space=sflag, size = 0x8, scoped, tag = 'scoped memory for tpu_custom_call.1']
    #allocation4 [shape = 's32[2]{0}', space=sflag, size = 0x8, scoped, tag = 'scoped memory for tpu_custom_call.1']
    #allocation5 [shape = 'u8[262144]{0}', space=vmem, size = 0x40000, scoped, tag = 'input window, operand 1, single buffered']
    #allocation6 [shape = 's32[1]{0}', space=sflag, size = 0x4, scoped, tag = 'scoped memory for tpu_custom_call.1']
    #allocation7 [shape = 'u8[1024]{0}', space=vmem, size = 0x400, scoped, tag = 'input window, operand 2, single buffered']
    #allocation8 [shape = 'u8[32768]{0}', space=vmem, size = 0x8000, scoped, tag = 'output window, operand 0']
    %8 = vsyncpa [#allocation3], 0
    %s9 = scalar_lea.sflag [#allocation3], 1
    %10 = vsyncpa %s9, 0
    %11 = vsyncpa [#allocation6], 0
    %12 = vsyncpa [#allocation4], 0
    %s13 = scalar_lea.sflag [#allocation4], 1
    %14 = vsyncpa %s13, 0
    loop: start=0, step=1, limit=4
    $region2: #{tpu_custom_call.1} parent=1 // loop_pre_header
      _
    $region3: #{tpu_custom_call.1} parent=1 // loop_header
      %s16 = sphi 0, %s20
      %p17 = scmp.ge.s32.totalorder %s16, 4
      %s26 = sphi 0, %s28
      %s29 = sphi 0, %s26
      %s30 = sphi 0, %s29
      %s46 = sphi 0, %s30
      %s50 = sphi 0, %s50
      %s52 = sphi 0, %s50
      %s53 = sphi 0, %s52
      %s67 = sphi 0, %s53
      %s71 = sphi 0, %s71
      %s73 = sphi 0, %s71
      %s74 = sphi 0, %s73
      %s88 = sphi 0, %s74
      %s94 = sphi 0, %s96
      %s97 = sphi 0, %s94
      %s98 = sphi 0, %s97
      %s114 = sphi 0, %s98
    $region4: #{tpu_custom_call.1} parent=1 // loop_header_branch
      %19 = sbr.rel (%p17) target = $region8
    $region5: #{tpu_custom_call.1} parent=1 // loop_body
      %s21 = ssub.s32 %s16, 1
      %s22 = ssub.s32 %s16, 2
      %s23 = sadd.s32 %s16, 1
      %s24 = ssub.s32 %s16, %s23
      %p25 = scmp.eq.s32.totalorder %s24, 0
      %s27 = sadd.s32 %s26, 1
      %s28 = scalar_select %p25, %s26, %s27
      %p31 = pneg %p25
      %p32 = scmp.eq.s32.totalorder %s16, 1
      %p33 = por %p31, %p32
      %p34 = scmp.ne.s32.totalorder %s26, %s29
      %p35 = scmp.eq.s32.totalorder %s16, 0
      %p36 = por %p34, %p35
      %p37 = scmp.ne.s32.totalorder %s26, %s29
      %p38 = scmp.eq.s32.totalorder %s21, 1
      %p39 = por %p37, %p38
      %p40 = scmp.ne.s32.totalorder %s29, %s30
      %p41 = scmp.eq.s32.totalorder %s21, 0
      %p42 = por %p40, %p41
      %p43 = scmp.ne.s32.totalorder %s29, %s30
      %p44 = scmp.eq.s32.totalorder %s22, 1
      %p45 = por %p43, %p44
      %p47 = scmp.ne.s32.totalorder %s30, %s46
      %p48 = scmp.eq.s32.totalorder %s22, 0
      %p49 = por %p47, %p48
      %s51 = sadd.s32 %s50, 1
      %p54 = scmp.eq.s32.totalorder %s16, 1
      %p55 = scmp.ne.s32.totalorder %s50, %s52
      %p56 = scmp.eq.s32.totalorder %s16, 0
      %p57 = por %p55, %p56
      %p58 = scmp.ne.s32.totalorder %s50, %s52
      %p59 = scmp.eq.s32.totalorder %s21, 1
      %p60 = por %p58, %p59
      %p61 = scmp.ne.s32.totalorder %s52, %s53
      %p62 = scmp.eq.s32.totalorder %s21, 0
      %p63 = por %p61, %p62
      %p64 = scmp.ne.s32.totalorder %s52, %s53
      %p65 = scmp.eq.s32.totalorder %s22, 1
      %p66 = por %p64, %p65
      %p68 = scmp.ne.s32.totalorder %s53, %s67
      %p69 = scmp.eq.s32.totalorder %s22, 0
      %p70 = por %p68, %p69
      %s72 = sadd.s32 %s71, 1
      %p75 = scmp.eq.s32.totalorder %s16, 1
      %p76 = scmp.ne.s32.totalorder %s71, %s73
      %p77 = scmp.eq.s32.totalorder %s16, 0
      %p78 = por %p76, %p77
      %p79 = scmp.ne.s32.totalorder %s71, %s73
      %p80 = scmp.eq.s32.totalorder %s21, 1
      %p81 = por %p79, %p80
      %p82 = scmp.ne.s32.totalorder %s73, %s74
      %p83 = scmp.eq.s32.totalorder %s21, 0
      %p84 = por %p82, %p83
      %p85 = scmp.ne.s32.totalorder %s73, %s74
      %p86 = scmp.eq.s32.totalorder %s22, 1
      %p87 = por %p85, %p86
      %p89 = scmp.ne.s32.totalorder %s74, %s88
      %p90 = scmp.eq.s32.totalorder %s22, 0
      %p91 = por %p89, %p90
      %s92 = ssub.s32 %s16, %s23
      %p93 = scmp.eq.s32.totalorder %s92, 0
      %s95 = sadd.s32 %s94, 1
      %s96 = scalar_select %p93, %s94, %s95
      %p99 = pneg %p93
      %p100 = scmp.eq.s32.totalorder %s16, 1
      %p101 = por %p99, %p100
      %p102 = scmp.ne.s32.totalorder %s94, %s97
      %p103 = scmp.eq.s32.totalorder %s16, 0
      %p104 = por %p102, %p103
      %p105 = scmp.ne.s32.totalorder %s94, %s97
      %p106 = scmp.eq.s32.totalorder %s21, 1
      %p107 = por %p105, %p106
      %p108 = scmp.ne.s32.totalorder %s97, %s98
      %p109 = scmp.eq.s32.totalorder %s21, 0
      %p110 = por %p108, %p109
      %p111 = scmp.ne.s32.totalorder %s97, %s98
      %p112 = scmp.eq.s32.totalorder %s22, 1
      %p113 = por %p111, %p112
      %p115 = scmp.ne.s32.totalorder %s98, %s114
      %p116 = scmp.eq.s32.totalorder %s22, 0
      %p117 = por %p115, %p116
      %p118 = scmp.le.s32.totalorder 1, %s16
      %p119 = scmp.lt.s32.totalorder %s16, 3
      %p120 = pnand %p118, %p119
      %p121 = pneg %p120
      // Predicated region
      $region9: #{tpu_custom_call.1} parent=5 // pred_check
        _
      $region10: #{tpu_custom_call.1} parent=5 // pred_check_branch
        %123 = sbr.rel (%p120) target = $region12
      $region11: #{tpu_custom_call.1} parent=5 // pred_region
        %s124 = ssub.s32 %s16, 1
        // Predicated region
        $region13: #{tpu_custom_call.1} parent=11 // pred_check
          %p125 = pneg %p63
        $region14: #{tpu_custom_call.1} parent=11 // pred_check_branch
          %127 = sbr.rel (%p125) target = $region16
        $region15: #{tpu_custom_call.1} parent=11 // pred_region
          %129 = vsyncadd [#allocation6], 0
          %s130 = sshll.u32 %s1, 4
          %s131 = int_to_ptr.hbm [resolvable:$true] %s130
          %s132 = sshll.u32 [#allocation5], 4
          %s133 = int_to_ptr.vmem [resolvable:$true] %s132
          %138 = dma.hbm_to_vmem [thread:$0]  %s131, 8192, %s133, [#allocation6], 256, 256, 16
        $region16: #{tpu_custom_call.1} parent=11 // pred_fallthru
          _
        // Predicated region
        $region17: #{tpu_custom_call.1} parent=11 // pred_check
          %p139 = pneg %p84
        $region18: #{tpu_custom_call.1} parent=11 // pred_check_branch
          %141 = sbr.rel (%p139) target = $region20
        $region19: #{tpu_custom_call.1} parent=11 // pred_region
          %143 = vsyncadd [#allocation6], 0
          %s145 = sshll.u32 %s2, 4
          %s146 = int_to_ptr.hbm [resolvable:$true] %s145
          %s147 = sshll.u32 [#allocation7], 4
          %s148 = int_to_ptr.vmem [resolvable:$true] %s147
          %150 = dma.hbm_to_vmem [thread:$0]  %s146, 32, %s148, [#allocation6]
        $region20: #{tpu_custom_call.1} parent=11 // pred_fallthru
          _
      $region12: #{tpu_custom_call.1} parent=5 // pred_fallthru
        _
      %p151 = scmp.lt.s32.totalorder %s16, 2
      // Predicated region
      $region21: #{tpu_custom_call.1} parent=5 // pred_check
        %p152 = pneg %p151
      $region22: #{tpu_custom_call.1} parent=5 // pred_check_branch
        %154 = sbr.rel (%p152) target = $region24
      $region23: #{tpu_custom_call.1} parent=5 // pred_region
        // Predicated region
        $region25: #{tpu_custom_call.1} parent=23 // pred_check
          %p155 = pneg %p36
        $region26: #{tpu_custom_call.1} parent=23 // pred_check_branch
          %157 = sbr.rel (%p155) target = $region28
        $region27: #{tpu_custom_call.1} parent=23 // pred_region
          %s158 = sand.u32 %s26, 1
          %s159 = scalar_lea.sflag [#allocation3], %s158
          %s160 = sand.u32 %s26, 1
          %s161 = smul.addr %s160, 32
          %s162 = scalar_lea.vmem [#allocation2], %s161
          %s163 = smul.u32 2, %s16
          %s164 = ssub.s32 3, %s163
          %p165 = scmp.lt.s32.totalorder %s164, 2
          %s166 = scalar_select %p165, %s164, 2
          %s167 = smul.u32 8, %s166
          %s168 = smul.u32 %s167, 2
          %s169 = ssub.s32 32, %s168
          %s170 = sshll.u32 %s169, 4
          %171 = vsyncadd %s159, %s170
          %p172 = scmp.ne.s32.totalorder 0, %s168
          %s173 = smul.addr %s163, 2
          %s174 = smul.addr %s173, 8
          %s175 = scalar_lea.hbm %s0, %s174
          %s176 = smul.u32 16, %s166
          %s177 = sshll.u32 %s175, 4
          %s178 = int_to_ptr.hbm [resolvable:$true] %s177
          %s179 = sshll.u32 %s162, 4
          %s180 = int_to_ptr.vmem [resolvable:$true] %s179
          %s181 = sshll.u32 %s176, 4
          %185 = dma.hbm_to_vmem [thread:$0]  (%p172), %s178, %s181, %s180, %s159, 256, 256, 16
        $region28: #{tpu_custom_call.1} parent=23 // pred_fallthru
          _
      $region24: #{tpu_custom_call.1} parent=5 // pred_fallthru
        _
      %p186 = scmp.le.s32.totalorder 1, %s16
      %p187 = scmp.lt.s32.totalorder %s16, 3
      %p188 = pnand %p186, %p187
      %p189 = pneg %p188
      // Predicated region
      $region29: #{tpu_custom_call.1} parent=5 // pred_check
        _
      $region30: #{tpu_custom_call.1} parent=5 // pred_check_branch
        %191 = sbr.rel (%p188) target = $region32
      $region31: #{tpu_custom_call.1} parent=5 // pred_region
        %s192 = ssub.s32 %s16, 1
        %s193 = sand.u32 %s29, 1
        %s194 = scalar_lea.sflag [#allocation3], %s193
        %s195 = sand.u32 %s29, 1
        %s196 = smul.addr %s195, 32
        %s197 = scalar_lea.vmem [#allocation2], %s196
        // Predicated region
        $region33: #{tpu_custom_call.1} parent=31 // pred_check
          %p198 = pneg %p42
        $region34: #{tpu_custom_call.1} parent=31 // pred_check_branch
          %200 = sbr.rel (%p198) target = $region36
        $region35: #{tpu_custom_call.1} parent=31 // pred_region
          %202 = dma.done %s194, 512
        $region36: #{tpu_custom_call.1} parent=31 // pred_fallthru
          _
        // Predicated region
        $region37: #{tpu_custom_call.1} parent=31 // pred_check
          %p203 = pneg %p63
        $region38: #{tpu_custom_call.1} parent=31 // pred_check_branch
          %205 = sbr.rel (%p203) target = $region40
        $region39: #{tpu_custom_call.1} parent=31 // pred_region
          %207 = dma.done [#allocation6], 8192
        $region40: #{tpu_custom_call.1} parent=31 // pred_fallthru
          _
        // Predicated region
        $region41: #{tpu_custom_call.1} parent=31 // pred_check
          %p208 = pneg %p84
        $region42: #{tpu_custom_call.1} parent=31 // pred_check_branch
          %210 = sbr.rel (%p208) target = $region44
        $region43: #{tpu_custom_call.1} parent=31 // pred_region
          %212 = dma.done [#allocation6], 32
        $region44: #{tpu_custom_call.1} parent=31 // pred_fallthru
          _
        %s213 = sand.u32 %s29, 1
        %s214 = scalar_lea.sflag [#allocation3], %s213
        %s215 = sand.u32 %s29, 1
        %s216 = smul.addr %s215, 32
        %s217 = scalar_lea.vmem [#allocation2], %s216
        %p218 = pneg %p42
        %p219 = pneg %p39
        %p220 = pneg %p63
        %p221 = pneg %p60
        %p222 = pneg %p84
        %p223 = pneg %p81
        %p224 = pneg %p110
        %p225 = pneg %p107
        %s226 = sand.u32 %s97, 1
        %s227 = scalar_lea.sflag [#allocation4], %s226
        %s228 = sand.u32 %s97, 1
        %s229 = smul.addr %s228, 32
        %s230 = scalar_lea.vmem [#allocation8], %s229
        %s231 = smul.u32 2, %s21
        %s232 = ssub.s32 3, %s231
        %p233 = scmp.lt.s32.totalorder %s232, 2
        %s234 = scalar_select %p233, %s232, 2
        %s235 = smul.u32 8, %s234
        %s236 = smul.u32 %s235, 2
        %s237 = smul.u32 2, %s21
        %s238 = ssub.s32 3, %s237
        %p239 = scmp.lt.s32.totalorder %s238, 2
        %s240 = scalar_select %p239, %s238, 2
        %s241 = smul.u32 8, %s240
        %s242 = smul.u32 %s241, 2
        %v243 = vld [vmem:[%s197] sm:$0xff]
        %v244 = vld [vmem:[%s197 + $0x8] sm:$0xff]
        %v245 = vld [vmem:[%s197 + $0x10] sm:$0xff]
        %v246 = vld [vmem:[%s197 + $0x18] sm:$0xff]
        %v247 = vld [vmem:[#allocation5] sm:$0xff]
        %v248 = vld [vmem:[#allocation5 + $0x8] sm:$0xff]
        %v249 = vld [vmem:[#allocation5 + $0x10] sm:$0xff]
        %v250 = vld [vmem:[#allocation5 + $0x18] sm:$0xff]
        %v251 = vld [vmem:[#allocation5 + $0x20] sm:$0xff]
        %v252 = vld [vmem:[#allocation5 + $0x28] sm:$0xff]
        %v253 = vld [vmem:[#allocation5 + $0x30] sm:$0xff]
        %v254 = vld [vmem:[#allocation5 + $0x38] sm:$0xff]
        %v255 = vld [vmem:[#allocation5 + $0x40] sm:$0xff]
        %v256 = vld [vmem:[#allocation5 + $0x48] sm:$0xff]
        %v257 = vld [vmem:[#allocation5 + $0x50] sm:$0xff]
        %v258 = vld [vmem:[#allocation5 + $0x58] sm:$0xff]
        %v259 = vld [vmem:[#allocation5 + $0x60] sm:$0xff]
        %v260 = vld [vmem:[#allocation5 + $0x68] sm:$0xff]
        %v261 = vld [vmem:[#allocation5 + $0x70] sm:$0xff]
        %v262 = vld [vmem:[#allocation5 + $0x78] sm:$0xff]
        %v263 = vld [vmem:[#allocation5 + $0x80] sm:$0xff]
        %v264 = vld [vmem:[#allocation5 + $0x88] sm:$0xff]
        %v265 = vld [vmem:[#allocation5 + $0x90] sm:$0xff]
        %v266 = vld [vmem:[#allocation5 + $0x98] sm:$0xff]
        %v267 = vld [vmem:[#allocation5 + $0xa0] sm:$0xff]
        %v268 = vld [vmem:[#allocation5 + $0xa8] sm:$0xff]
        %v269 = vld [vmem:[#allocation5 + $0xb0] sm:$0xff]
        %v270 = vld [vmem:[#allocation5 + $0xb8] sm:$0xff]
        %v271 = vld [vmem:[#allocation5 + $0xc0] sm:$0xff]
        %v272 = vld [vmem:[#allocation5 + $0xc8] sm:$0xff]
        %v273 = vld [vmem:[#allocation5 + $0xd0] sm:$0xff]
        %v274 = vld [vmem:[#allocation5 + $0xd8] sm:$0xff]
        %v275 = vld [vmem:[#allocation5 + $0xe0] sm:$0xff]
        %v276 = vld [vmem:[#allocation5 + $0xe8] sm:$0xff]
        %v277 = vld [vmem:[#allocation5 + $0xf0] sm:$0xff]
        %v278 = vld [vmem:[#allocation5 + $0xf8] sm:$0xff]
        %v279 = vld [vmem:[#allocation5 + $0x100] sm:$0xff]
        %v280 = vld [vmem:[#allocation5 + $0x108] sm:$0xff]
        %v281 = vld [vmem:[#allocation5 + $0x110] sm:$0xff]
        %v282 = vld [vmem:[#allocation5 + $0x118] sm:$0xff]
        %v283 = vld [vmem:[#allocation5 + $0x120] sm:$0xff]
        %v284 = vld [vmem:[#allocation5 + $0x128] sm:$0xff]
        %v285 = vld [vmem:[#allocation5 + $0x130] sm:$0xff]
        %v286 = vld [vmem:[#allocation5 + $0x138] sm:$0xff]
        %v287 = vld [vmem:[#allocation5 + $0x140] sm:$0xff]
        %v288 = vld [vmem:[#allocation5 + $0x148] sm:$0xff]
        %v289 = vld [vmem:[#allocation5 + $0x150] sm:$0xff]
        %v290 = vld [vmem:[#allocation5 + $0x158] sm:$0xff]
        %v291 = vld [vmem:[#allocation5 + $0x160] sm:$0xff]
        %v292 = vld [vmem:[#allocation5 + $0x168] sm:$0xff]
        %v293 = vld [vmem:[#allocation5 + $0x170] sm:$0xff]
        %v294 = vld [vmem:[#allocation5 + $0x178] sm:$0xff]
        %v295 = vld [vmem:[#allocation5 + $0x180] sm:$0xff]
        %v296 = vld [vmem:[#allocation5 + $0x188] sm:$0xff]
        %v297 = vld [vmem:[#allocation5 + $0x190] sm:$0xff]
        %v298 = vld [vmem:[#allocation5 + $0x198] sm:$0xff]
        %v299 = vld [vmem:[#allocation5 + $0x1a0] sm:$0xff]
        %v300 = vld [vmem:[#allocation5 + $0x1a8] sm:$0xff]
        %v301 = vld [vmem:[#allocation5 + $0x1b0] sm:$0xff]
        %v302 = vld [vmem:[#allocation5 + $0x1b8] sm:$0xff]
        %v303 = vld [vmem:[#allocation5 + $0x1c0] sm:$0xff]
        %v304 = vld [vmem:[#allocation5 + $0x1c8] sm:$0xff]
        %v305 = vld [vmem:[#allocation5 + $0x1d0] sm:$0xff]
        %v306 = vld [vmem:[#allocation5 + $0x1d8] sm:$0xff]
        %v307 = vld [vmem:[#allocation5 + $0x1e0] sm:$0xff]
        %v308 = vld [vmem:[#allocation5 + $0x1e8] sm:$0xff]
        %v309 = vld [vmem:[#allocation5 + $0x1f0] sm:$0xff]
        %v310 = vld [vmem:[#allocation5 + $0x1f8] sm:$0xff]
        %v311 = vld [vmem:[#allocation7] sm:$0x3]
        %v313 = vperm.slane %v311, 0
        %v314 = vperm.slane %v311, 1
        %317 = vmatpush.msra.mxu0 %v277
        %318 = vmatpush.msra.mxu0 %v275
        %319 = vmatpush.msra.mxu0 %v273
        %320 = vmatpush.msra.mxu0 %v271
        %321 = vmatpush.msra.mxu0 %v269
        %322 = vmatpush.msra.mxu0 %v267
        %323 = vmatpush.msra.mxu0 %v265
        %324 = vmatpush.msra.mxu0 %v263
        %325 = vmatpush.msra.mxu0 %v261
        %326 = vmatpush.msra.mxu0 %v259
        %327 = vmatpush.msra.mxu0 %v257
        %328 = vmatpush.msra.mxu0 %v255
        %329 = vmatpush.msra.mxu0 %v253
        %330 = vmatpush.msra.mxu0 %v251
        %331 = vmatpush.msra.mxu0 %v249
        %332 = vmatpush.msra.mxu0 %v247
        %333 = vmatmul.f32.gmra.mxu0 %v243
        %v334 = vpop.f32.mrf.mxu0
        %v335 = vadd.f32 %v313, %v334
        %336 = vmatmul.f32.gmra.mxu0 %v245
        %v337 = vpop.f32.mrf.mxu0
        %v338 = vadd.f32 %v313, %v337
        %339 = vdwg.mxu0
        %340 = vmatpush.msra.mxu0 %v309
        %341 = vmatpush.msra.mxu0 %v307
        %342 = vmatpush.msra.mxu0 %v305
        %343 = vmatpush.msra.mxu0 %v303
        %344 = vmatpush.msra.mxu0 %v301
        %345 = vmatpush.msra.mxu0 %v299
        %346 = vmatpush.msra.mxu0 %v297
        %347 = vmatpush.msra.mxu0 %v295
        %348 = vmatpush.msra.mxu0 %v293
        %349 = vmatpush.msra.mxu0 %v291
        %350 = vmatpush.msra.mxu0 %v289
        %351 = vmatpush.msra.mxu0 %v287
        %352 = vmatpush.msra.mxu0 %v285
        %353 = vmatpush.msra.mxu0 %v283
        %354 = vmatpush.msra.mxu0 %v281
        %355 = vmatpush.msra.mxu0 %v279
        %356 = vmatmul.f32.gmra.mxu0 %v244
        %v357 = vpop.f32.mrf.mxu0
        %v358 = vadd.f32 %v335, %v357
        %359 = vmatmul.f32.gmra.mxu0 %v246
        %v360 = vpop.f32.mrf.mxu0
        %v361 = vadd.f32 %v338, %v360
        %362 = vdwg.mxu0
        %363 = vmatpush.msra.mxu0 %v278
        %364 = vmatpush.msra.mxu0 %v276
        %365 = vmatpush.msra.mxu0 %v274
        %366 = vmatpush.msra.mxu0 %v272
        %367 = vmatpush.msra.mxu0 %v270
        %368 = vmatpush.msra.mxu0 %v268
        %369 = vmatpush.msra.mxu0 %v266
        %370 = vmatpush.msra.mxu0 %v264
        %371 = vmatpush.msra.mxu0 %v262
        %372 = vmatpush.msra.mxu0 %v260
        %373 = vmatpush.msra.mxu0 %v258
        %374 = vmatpush.msra.mxu0 %v256
        %375 = vmatpush.msra.mxu0 %v254
        %376 = vmatpush.msra.mxu0 %v252
        %377 = vmatpush.msra.mxu0 %v250
        %378 = vmatpush.msra.mxu0 %v248
        %379 = vmatmul.f32.gmra.mxu0 %v243
        %v380 = vpop.f32.mrf.mxu0
        %v381 = vadd.f32 %v314, %v380
        %382 = vmatmul.f32.gmra.mxu0 %v245
        %v383 = vpop.f32.mrf.mxu0
        %v384 = vadd.f32 %v314, %v383
        %385 = vdwg.mxu0
        %386 = vmatpush.msra.mxu0 %v310
        %387 = vmatpush.msra.mxu0 %v308
        %388 = vmatpush.msra.mxu0 %v306
        %389 = vmatpush.msra.mxu0 %v304
        %390 = vmatpush.msra.mxu0 %v302
        %391 = vmatpush.msra.mxu0 %v300
        %392 = vmatpush.msra.mxu0 %v298
        %393 = vmatpush.msra.mxu0 %v296
        %394 = vmatpush.msra.mxu0 %v294
        %395 = vmatpush.msra.mxu0 %v292
        %396 = vmatpush.msra.mxu0 %v290
        %397 = vmatpush.msra.mxu0 %v288
        %398 = vmatpush.msra.mxu0 %v286
        %399 = vmatpush.msra.mxu0 %v284
        %400 = vmatpush.msra.mxu0 %v282
        %401 = vmatpush.msra.mxu0 %v280
        %402 = vmatmul.f32.gmra.mxu0 %v244
        %v403 = vpop.f32.mrf.mxu0
        %v404 = vadd.f32 %v381, %v403
        %405 = vmatmul.f32.gmra.mxu0 %v246
        %v406 = vpop.f32.mrf.mxu0
        %v407 = vadd.f32 %v384, %v406
        %408 = vdwg.mxu0
        %409 = vst [vmem:[%s230] sm:$0xff] %v358
        %410 = vst [vmem:[%s230 + $0x8] sm:$0xff] %v404
        %411 = vst [vmem:[%s230 + $0x10] sm:$0xff] %v361
        %412 = vst [vmem:[%s230 + $0x18] sm:$0xff] %v407
        %s413 = sand.u32 %s97, 1
        %s414 = scalar_lea.sflag [#allocation4], %s413
        %s415 = sand.u32 %s97, 1
        %s416 = smul.addr %s415, 32
        %s417 = scalar_lea.vmem [#allocation8], %s416
        // Predicated region
        $region45: #{tpu_custom_call.1} parent=31 // pred_check
          %p418 = pneg %p107
        $region46: #{tpu_custom_call.1} parent=31 // pred_check_branch
          %420 = sbr.rel (%p418) target = $region48
        $region47: #{tpu_custom_call.1} parent=31 // pred_region
          %s421 = smul.u32 2, %s21
          %s422 = ssub.s32 3, %s421
          %p423 = scmp.lt.s32.totalorder %s422, 2
          %s424 = scalar_select %p423, %s422, 2
          %s425 = smul.u32 8, %s424
          %s426 = smul.u32 %s425, 2
          %s427 = ssub.s32 32, %s426
          %s428 = sshll.u32 %s427, 4
          %429 = vsyncadd %s414, %s428
          %p430 = scmp.ne.s32.totalorder 0, %s426
          %s431 = smul.addr %s421, 2
          %s432 = smul.addr %s431, 8
          %s433 = scalar_lea.hbm %s3, %s432
          %s434 = smul.u32 16, %s424
          %s435 = sshll.u32 %s417, 4
          %s436 = int_to_ptr.vmem [resolvable:$true] %s435
          %s437 = sshll.u32 %s433, 4
          %s438 = int_to_ptr.hbm [resolvable:$true] %s437
          %s439 = sshll.u32 %s434, 4
          %443 = dma.vmem_to_hbm [thread:$0]  (%p430), %s436, %s439, %s438, %s414, 256, 256, 16
        $region48: #{tpu_custom_call.1} parent=31 // pred_fallthru
          _
      $region32: #{tpu_custom_call.1} parent=5 // pred_fallthru
        _
      %p444 = scmp.le.s32.totalorder 2, %s16
      // Predicated region
      $region49: #{tpu_custom_call.1} parent=5 // pred_check
        %p445 = pneg %p444
      $region50: #{tpu_custom_call.1} parent=5 // pred_check_branch
        %447 = sbr.rel (%p445) target = $region52
      $region51: #{tpu_custom_call.1} parent=5 // pred_region
        %s448 = ssub.s32 %s16, 2
        // Predicated region
        $region53: #{tpu_custom_call.1} parent=51 // pred_check
          %p449 = pneg %p113
        $region54: #{tpu_custom_call.1} parent=51 // pred_check_branch
          %451 = sbr.rel (%p449) target = $region56
        $region55: #{tpu_custom_call.1} parent=51 // pred_region
          %s452 = sand.u32 %s98, 1
          %s453 = scalar_lea.sflag [#allocation4], %s452
          %s454 = sand.u32 %s98, 1
          %s455 = smul.addr %s454, 32
          %s456 = scalar_lea.vmem [#allocation8], %s455
          %458 = dma.done %s453, 512
        $region56: #{tpu_custom_call.1} parent=51 // pred_fallthru
          _
      $region52: #{tpu_custom_call.1} parent=5 // pred_fallthru
        _
    $region6: #{tpu_custom_call.1} parent=1 // loop_footer
      %s20 = sadd.s32 1, %s16
    $region7: #{tpu_custom_call.1} parent=1 // loop_footer_branch
      %15 = sbr.rel target = $region3
    $region8: #{tpu_custom_call.1} parent=1 // loop_exit
      _
    %459 = vsyncpa [#allocation3], 1
    %s460 = scalar_lea.sflag [#allocation3], 1
    %461 = vsyncpa %s460, 1
    %462 = vsyncpa [#allocation6], 1
    %463 = vsyncpa [#allocation4], 1
    %s464 = scalar_lea.sflag [#allocation4], 1
    %465 = vsyncpa %s464, 1

</llo_original>
